<compile_context>
chip_gen: v7x
topology: tpu7x:2x2x1
jax: 0.10.0
libtpu: 0.0.40
codegen_flags: <defaults>
</compile_context>

<pallas_src>
import functools
from typing import NamedTuple

import jax
import jax.numpy as jnp
from jax.experimental import pallas as pl
from jax.experimental.pallas import tpu as pltpu


_PAD = 128  # lane width every layer's OUTPUT is padded to (K stays un-padded)


class Layout(NamedTuple):
    """Static layer sizes and sublane offsets into the packed weight slab."""
    dd: int   # dataset_input_dim
    da: int   # arch_num
    dh: int   # dataset_hid_dim  (he / decoder hidden width)
    hh: int   # hidden_dim       (arch hidden width)
    ch: int   # cross_hid_dim
    off_a: int; k_a: int   # fused block-diagonal encoder
    off_c: int; k_c: int   # fused fc_cross_1
    off_2: int; k_2: int   # fc_cross_2
    off_3: int; k_3: int   # fc_cross_3
    off_d: int; k_d: int   # decoder hidden
    off_r: int; k_r: int   # reconstruction


# ---------------------------------------------------------------------------
# Kernel
# ---------------------------------------------------------------------------
def _predictor_kernel(x_ref, w_ref, b_ref, out_ref, loss_ref, *, layout, inv_n):
    lo = layout
    f32 = jnp.float32
    B = x_ref.shape[0]

    x = x_ref[...]                                   # (B, dd+da): lanes [xd | xa]

    def mm(v, off, k):
        # static sublane window into the packed slab; real (un-padded) K rows
        return jnp.dot(v, w_ref[off:off + k, :], preferred_element_type=f32)

    def bias(i):
        # biases are pre-replicated to B rows -> plain aligned vld, no broadcast
        return b_ref[i * B:(i + 1) * B, :]

    # fused block-diagonal encoder: output lanes [0:dh)=he, [dh:dh+hh)=h, rest 0
    a1 = jnp.maximum(mm(x, lo.off_a, lo.k_a) + bias(0), 0.0)

    # --- autoencoder decoder branch (reconstruction loss only); independent of
    #     the cross head below, so the two MXU chains can overlap -------------
    hd = jnp.maximum(mm(a1[:, :lo.dh], lo.off_d, lo.k_d) + bias(4), 0.0)
    recon = mm(hd[:, :lo.dh], lo.off_r, lo.k_r) + bias(5)
    diff = recon[:, :lo.dd] - x[:, :lo.dd]           # xd sits in lanes [0:dd)
    loss_ref[0, 0] = jnp.sum(diff * diff) * inv_n    # nn.MSELoss (mean), 1/n precomputed

    # --- cross head: fc_cross_1 folded with both encoder output projections ---
    z1 = jnp.maximum(mm(a1[:, :lo.dh + lo.hh], lo.off_c, lo.k_c) + bias(1), 0.0)
    z2 = jnp.maximum(mm(z1[:, :lo.ch], lo.off_2, lo.k_2) + bias(2), 0.0)
    out_ref[...] = mm(z2[:, :lo.ch], lo.off_3, lo.k_3) + bias(3)   # only lane 0 is real


# ---------------------------------------------------------------------------
# Wrapper (jitted: lane-pack + kernel + output slice = one dispatch)
# ---------------------------------------------------------------------------
@functools.partial(jax.jit, static_argnames=("layout",))
def predictor_forward(arch_input, dataset_feature, w_slab, b_slab, *, layout):
    B = arch_input.shape[0]
    dd = dataset_feature.shape[1]
    assert b_slab.shape[0] == 6 * B, "bias slab was packed for a different batch"

    # Lane packing only: [xd | xa]; xd first so the recon loss reads lanes [0:dd)
    # without a lane rotate.  Fused into the jit, no separate dispatch.
    x = jnp.concatenate([dataset_feature.astype(jnp.float32),
                         arch_input.astype(jnp.float32)], axis=1)

    inv_n = 1.0 / float(B * dd)

    vmem = pl.BlockSpec(memory_space=pltpu.MemorySpace.VMEM)
    smem = pl.BlockSpec(memory_space=pltpu.MemorySpace.SMEM)

    total_k = int(w_slab.shape[0])
    flops = 2 * B * total_k * _PAD
    bytes_accessed = 4 * (x.size + w_slab.size + b_slab.size + B * _PAD + 1)

    out_pad, loss = pl.pallas_call(
        functools.partial(_predictor_kernel, layout=layout, inv_n=inv_n),
        out_shape=(
            jax.ShapeDtypeStruct((B, _PAD), jnp.float32),   # lane-dense prediction
            jax.ShapeDtypeStruct((1, 1), jnp.float32),      # scalar recon loss (SMEM)
        ),
        in_specs=[vmem, vmem, vmem],
        out_specs=(vmem, smem),
        cost_estimate=pl.CostEstimate(
            flops=flops, transcendentals=0, bytes_accessed=bytes_accessed),
    )(x, w_slab, b_slab)
    return out_pad[:, :1], loss[0, 0]


# ---------------------------------------------------------------------------
# Parameter construction / offline folding + packing
# ---------------------------------------------------------------------------
def init_params(key, arch_num, arch_embed_dim, hidden_dim, cross_hid_dim,
                dataset_input_dim, dataset_hid_dim, dataset_out_dim):
    """Deterministic synthetic parameters.  Weights stored as (in, out)."""
    ks = iter(jax.random.split(key, 18))

    def w(i, o, scale=0.1):
        return (scale * jax.random.normal(next(ks), (i, o))).astype(jnp.float32)

    def b(o, scale=0.1):
        return (scale * jax.random.normal(next(ks), (1, o))).astype(jnp.float32)

    w1_full = w(arch_embed_dim + dataset_out_dim, cross_hid_dim)
    return dict(
        # arch encoder (PNN stand-in)
        wa1=w(arch_num, hidden_dim),               ba1=b(hidden_dim),
        wa2=w(hidden_dim, arch_embed_dim),         ba2=b(arch_embed_dim),
        # dataset encoder
        we1=w(dataset_input_dim, dataset_hid_dim), be1=b(dataset_hid_dim),
        we2=w(dataset_hid_dim, dataset_out_dim),   be2=b(dataset_out_dim),
        # dataset decoder
        wd1=w(dataset_out_dim, dataset_hid_dim),   bd1=b(dataset_hid_dim),
        wd2=w(dataset_hid_dim, dataset_input_dim), bd2=b(dataset_input_dim),
        # cross head (fc_cross_1 split into arch / dataset halves)
        w1a=w1_full[:arch_embed_dim],
        w1d=w1_full[arch_embed_dim:],
        b1=b(cross_hid_dim),
        w2=w(cross_hid_dim, cross_hid_dim),        b2=b(cross_hid_dim),
        w3=w(cross_hid_dim, 1),                    b3=b(1),
    )


def pack_params(p, batch):
    """Offline linear folding + lane/block-diagonal packing into two slabs.

    Returns:
      w_slab : (total_K, 128) f32, un-padded contraction dims stacked on sublanes
      b_slab : (6*batch, 128) f32, per-layer biases pre-replicated to `batch` rows
      layout : static offsets / sizes for the kernel
    """
    f32 = jnp.float32
    da, hh = p["wa1"].shape
    dd, dh = p["we1"].shape
    ch = p["w2"].shape[0]
    assert dd + da <= _PAD and dh + hh <= _PAD and ch <= _PAD

    # ---- offline folding (exact linear algebra; f32 reassociation only) ----
    wc1a = p["wa2"] @ p["w1a"]                 # (hh, ch) arch hidden   -> cross hid
    wc1d = p["we2"] @ p["w1d"]                 # (dh, ch) dataset hidden-> cross hid
    wdd = p["we2"] @ p["wd1"]                  # (dh, dh) dataset hidden-> decoder hidden
    b1f = p["b1"] + p["ba2"] @ p["w1a"] + p["be2"] @ p["w1d"]
    bddf = p["bd1"] + p["be2"] @ p["wd1"]

    def lanes(w, col0=0):
        k, n = w.shape
        return jnp.zeros((k, _PAD), f32).at[:, col0:col0 + n].set(w.astype(f32))

    # fused block-diagonal encoder: input lanes [xd | xa] -> output lanes [he | h]
    w_a = jnp.zeros((dd + da, _PAD), f32)
    w_a = w_a.at[:dd, :dh].set(p["we1"].astype(f32))
    w_a = w_a.at[dd:, dh:dh + hh].set(p["wa1"].astype(f32))

    # fused fc_cross_1: input lanes [he | h] -> cross hidden
    w_c = jnp.zeros((dh + hh, _PAD), f32)
    w_c = w_c.at[:dh, :ch].set(wc1d.astype(f32))
    w_c = w_c.at[dh:, :ch].set(wc1a.astype(f32))

    weights = [w_a, w_c, lanes(p["w2"]), lanes(p["w3"]), lanes(wdd), lanes(p["wd2"])]
    offs, k = [], 0
    for w in weights:
        offs.append(k)
        k += w.shape[0]
    pad_rows = (-k) % 8                        # keep sublane alignment of the slab
    if pad_rows:
        weights.append(jnp.zeros((pad_rows, _PAD), f32))
    w_slab = jnp.concatenate(weights, axis=0)

    def brow(b, col0=0):
        row = jnp.zeros((1, _PAD), f32).at[:, col0:col0 + b.shape[1]].set(b.astype(f32))
        return jnp.tile(row, (batch, 1))       # pre-replicated -> plain vld in kernel

    b_a = jnp.zeros((1, _PAD), f32)
    b_a = b_a.at[:, :dh].set(p["be1"].astype(f32)).at[:, dh:dh + hh].set(p["ba1"].astype(f32))
    b_a = jnp.tile(b_a, (batch, 1))

    b_slab = jnp.concatenate(
        [b_a, brow(b1f), brow(p["b2"]), brow(p["b3"]), brow(bddf), brow(p["bd2"])], axis=0)

    layout = Layout(dd=dd, da=da, dh=dh, hh=hh, ch=ch,
                    off_a=offs[0], k_a=dd + da,
                    off_c=offs[1], k_c=dh + hh,
                    off_2=offs[2], k_2=ch,
                    off_3=offs[3], k_3=ch,
                    off_d=offs[4], k_d=dh,
                    off_r=offs[5], k_r=dh)
    return w_slab, b_slab, layout


# ---------------------------------------------------------------------------
# Plain-JAX reference (unfolded, original parameterization)
# ---------------------------------------------------------------------------
def reference_forward(xa, xd, p):
    relu = lambda t: jnp.maximum(t, 0.0)
    h = relu(xa @ p["wa1"] + p["ba1"])
    arch_emb = h @ p["wa2"] + p["ba2"]
    he = relu(xd @ p["we1"] + p["be1"])
    demb = he @ p["we2"] + p["be2"]
    hd = relu(demb @ p["wd1"] + p["bd1"])
    recon = hd @ p["wd2"] + p["bd2"]
    re_loss = jnp.mean((recon - xd) ** 2)
    cat = jnp.concatenate([arch_emb, demb], axis=-1)
    w1 = jnp.concatenate([p["w1a"], p["w1d"]], axis=0)
    z = relu(cat @ w1 + p["b1"])
    z = relu(z @ p["w2"] + p["b2"])
    out = z @ p["w3"] + p["b3"]
    return out, re_loss


if __name__ == "__main__":
    # Small, forward-consistent sizes (all feature dims <= 128).
    B = 8
    arch_num = 16
    arch_embed_dim = 32
    hidden_dim = 32
    cross_hid_dim = 64
    dataset_input_dim = 32
    dataset_hid_dim = 32
    dataset_out_dim = 16

    key = jax.random.PRNGKey(0)
    k_param, k_xa, k_xd = jax.random.split(key, 3)

    params = init_params(k_param, arch_num, arch_embed_dim, hidden_dim,
                         cross_hid_dim, dataset_input_dim, dataset_hid_dim,
                         dataset_out_dim)
    w_slab, b_slab, layout = pack_params(params, batch=B)

    arch_input = jax.random.normal(k_xa, (B, arch_num), dtype=jnp.float32)
    dataset_feature = jax.random.normal(k_xd, (B, dataset_input_dim), dtype=jnp.float32)

    out, re_loss = predictor_forward(arch_input, dataset_feature, w_slab, b_slab,
                                     layout=layout)
    out = jax.block_until_ready(out)
    re_loss = jax.block_until_ready(re_loss)

    ref_out, ref_loss = reference_forward(arch_input, dataset_feature, params)
    assert out.shape == (B, 1)
    # Offline folding reassociates f32 ops -> compare with slightly relaxed tolerance.
    assert jnp.allclose(out, ref_out, atol=2e-4, rtol=2e-4)
    assert jnp.allclose(re_loss, ref_loss, atol=1e-4, rtol=1e-4)

    print("KERNEL_OK")
</pallas_src>

<mosaic_0001>
module attributes {stable_mosaic.version = 11 : i64} {
  func.func @_predictor_kernel(%arg0: memref<8x48xf32, #tpu.memory_space<vmem>>, %arg1: memref<304x128xf32, #tpu.memory_space<vmem>>, %arg2: memref<48x128xf32, #tpu.memory_space<vmem>>, %arg3: memref<8x128xf32, #tpu.memory_space<vmem>>, %arg4: memref<1x1xf32, #tpu.memory_space<smem>>) attributes {dimension_semantics = [], scalar_prefetch = 0 : i64, scratch_operands = 0 : i64, tpu.core_type = #tpu.core_type<tc>} {
    %c0 = arith.constant 0 : index
    %c0_0 = arith.constant 0 : index
    %0 = vector.load %arg0[%c0, %c0_0] : memref<8x48xf32, #tpu.memory_space<vmem>>, vector<8x48xf32>
    %c0_1 = arith.constant 0 : index
    %c0_2 = arith.constant 0 : index
    %1 = vector.load %arg1[%c0_1, %c0_2] : memref<304x128xf32, #tpu.memory_space<vmem>>, vector<48x128xf32>
    %cst = arith.constant dense<0.000000e+00> : vector<8x128xf32>
    %2 = tpu.matmul %0, %1, %cst {dimension_numbers = #tpu.dot_dimension_numbers<[1], [0], [0], [1], [0, 0, 1, 1], [], []>} : vector<8x48xf32>, vector<48x128xf32>, vector<8x128xf32> -> vector<8x128xf32>
    %c0_3 = arith.constant 0 : index
    %c0_4 = arith.constant 0 : index
    %3 = vector.load %arg2[%c0_3, %c0_4] : memref<48x128xf32, #tpu.memory_space<vmem>>, vector<8x128xf32>
    %4 = arith.addf %2, %3 : vector<8x128xf32>
    %cst_5 = arith.constant 0.000000e+00 : f32
    %5 = vector.broadcast %cst_5 : f32 to vector<8x128xf32>
    %6 = arith.maximumf %4, %5 : vector<8x128xf32>
    %7 = vector.extract_strided_slice %6 {offsets = [0, 0], sizes = [8, 32], strides = [1, 1]} : vector<8x128xf32> to vector<8x32xf32>
    %c240 = arith.constant 240 : index
    %c0_6 = arith.constant 0 : index
    %8 = vector.load %arg1[%c240, %c0_6] : memref<304x128xf32, #tpu.memory_space<vmem>>, vector<32x128xf32>
    %cst_7 = arith.constant dense<0.000000e+00> : vector<8x128xf32>
    %9 = tpu.matmul %7, %8, %cst_7 {dimension_numbers = #tpu.dot_dimension_numbers<[1], [0], [0], [1], [0, 0, 1, 1], [], []>} : vector<8x32xf32>, vector<32x128xf32>, vector<8x128xf32> -> vector<8x128xf32>
    %c32 = arith.constant 32 : index
    %c0_8 = arith.constant 0 : index
    %10 = vector.load %arg2[%c32, %c0_8] : memref<48x128xf32, #tpu.memory_space<vmem>>, vector<8x128xf32>
    %11 = arith.addf %9, %10 : vector<8x128xf32>
    %cst_9 = arith.constant 0.000000e+00 : f32
    %12 = vector.broadcast %cst_9 : f32 to vector<8x128xf32>
    %13 = arith.maximumf %11, %12 : vector<8x128xf32>
    %14 = vector.extract_strided_slice %13 {offsets = [0, 0], sizes = [8, 32], strides = [1, 1]} : vector<8x128xf32> to vector<8x32xf32>
    %c272 = arith.constant 272 : index
    %c0_10 = arith.constant 0 : index
    %15 = vector.load %arg1[%c272, %c0_10] : memref<304x128xf32, #tpu.memory_space<vmem>>, vector<32x128xf32>
    %cst_11 = arith.constant dense<0.000000e+00> : vector<8x128xf32>
    %16 = tpu.matmul %14, %15, %cst_11 {dimension_numbers = #tpu.dot_dimension_numbers<[1], [0], [0], [1], [0, 0, 1, 1], [], []>} : vector<8x32xf32>, vector<32x128xf32>, vector<8x128xf32> -> vector<8x128xf32>
    %c40 = arith.constant 40 : index
    %c0_12 = arith.constant 0 : index
    %17 = vector.load %arg2[%c40, %c0_12] : memref<48x128xf32, #tpu.memory_space<vmem>>, vector<8x128xf32>
    %18 = arith.addf %16, %17 : vector<8x128xf32>
    %19 = vector.extract_strided_slice %18 {offsets = [0, 0], sizes = [8, 32], strides = [1, 1]} : vector<8x128xf32> to vector<8x32xf32>
    %20 = vector.extract_strided_slice %0 {offsets = [0, 0], sizes = [8, 32], strides = [1, 1]} : vector<8x48xf32> to vector<8x32xf32>
    %21 = arith.subf %19, %20 : vector<8x32xf32>
    %22 = arith.mulf %21, %21 : vector<8x32xf32>
    %23 = vector.shape_cast %22 : vector<8x32xf32> to vector<1x8x32xf32>
    %cst_13 = arith.constant dense<0.000000e+00> : vector<1xf32>
    %24 = vector.multi_reduction <add>, %23, %cst_13 [1, 2] : vector<1x8x32xf32> to vector<1xf32>
    %25 = vector.shape_cast %24 : vector<1xf32> to vector<1x1x1xf32>
    %26 = vector.extract %25[0, 0, 0] : f32 from vector<1x1x1xf32>
    %cst_14 = arith.constant 3.906250e-03 : f32
    %27 = arith.mulf %26, %cst_14 : f32
    %c0_15 = arith.constant 0 : index
    %c0_16 = arith.constant 0 : index
    %28 = memref.load %arg4[%c0_15, %c0_16] : memref<1x1xf32, #tpu.memory_space<smem>>
    memref.store %27, %arg4[%c0_15, %c0_16] : memref<1x1xf32, #tpu.memory_space<smem>>
    %29 = vector.extract_strided_slice %6 {offsets = [0, 0], sizes = [8, 64], strides = [1, 1]} : vector<8x128xf32> to vector<8x64xf32>
    %c48 = arith.constant 48 : index
    %c0_17 = arith.constant 0 : index
    %30 = vector.load %arg1[%c48, %c0_17] : memref<304x128xf32, #tpu.memory_space<vmem>>, vector<64x128xf32>
    %cst_18 = arith.constant dense<0.000000e+00> : vector<8x128xf32>
    %31 = tpu.matmul %29, %30, %cst_18 {dimension_numbers = #tpu.dot_dimension_numbers<[1], [0], [0], [1], [0, 0, 1, 1], [], []>} : vector<8x64xf32>, vector<64x128xf32>, vector<8x128xf32> -> vector<8x128xf32>
    %c8 = arith.constant 8 : index
    %c0_19 = arith.constant 0 : index
    %32 = vector.load %arg2[%c8, %c0_19] : memref<48x128xf32, #tpu.memory_space<vmem>>, vector<8x128xf32>
    %33 = arith.addf %31, %32 : vector<8x128xf32>
    %cst_20 = arith.constant 0.000000e+00 : f32
    %34 = vector.broadcast %cst_20 : f32 to vector<8x128xf32>
    %35 = arith.maximumf %33, %34 : vector<8x128xf32>
    %36 = vector.extract_strided_slice %35 {offsets = [0, 0], sizes = [8, 64], strides = [1, 1]} : vector<8x128xf32> to vector<8x64xf32>
    %c112 = arith.constant 112 : index
    %c0_21 = arith.constant 0 : index
    %37 = vector.load %arg1[%c112, %c0_21] : memref<304x128xf32, #tpu.memory_space<vmem>>, vector<64x128xf32>
    %cst_22 = arith.constant dense<0.000000e+00> : vector<8x128xf32>
    %38 = tpu.matmul %36, %37, %cst_22 {dimension_numbers = #tpu.dot_dimension_numbers<[1], [0], [0], [1], [0, 0, 1, 1], [], []>} : vector<8x64xf32>, vector<64x128xf32>, vector<8x128xf32> -> vector<8x128xf32>
    %c16 = arith.constant 16 : index
    %c0_23 = arith.constant 0 : index
    %39 = vector.load %arg2[%c16, %c0_23] : memref<48x128xf32, #tpu.memory_space<vmem>>, vector<8x128xf32>
    %40 = arith.addf %38, %39 : vector<8x128xf32>
    %cst_24 = arith.constant 0.000000e+00 : f32
    %41 = vector.broadcast %cst_24 : f32 to vector<8x128xf32>
    %42 = arith.maximumf %40, %41 : vector<8x128xf32>
    %43 = vector.extract_strided_slice %42 {offsets = [0, 0], sizes = [8, 64], strides = [1, 1]} : vector<8x128xf32> to vector<8x64xf32>
    %c176 = arith.constant 176 : index
    %c0_25 = arith.constant 0 : index
    %44 = vector.load %arg1[%c176, %c0_25] : memref<304x128xf32, #tpu.memory_space<vmem>>, vector<64x128xf32>
    %cst_26 = arith.constant dense<0.000000e+00> : vector<8x128xf32>
    %45 = tpu.matmul %43, %44, %cst_26 {dimension_numbers = #tpu.dot_dimension_numbers<[1], [0], [0], [1], [0, 0, 1, 1], [], []>} : vector<8x64xf32>, vector<64x128xf32>, vector<8x128xf32> -> vector<8x128xf32>
    %c24 = arith.constant 24 : index
    %c0_27 = arith.constant 0 : index
    %46 = vector.load %arg2[%c24, %c0_27] : memref<48x128xf32, #tpu.memory_space<vmem>>, vector<8x128xf32>
    %47 = arith.addf %45, %46 : vector<8x128xf32>
    %c0_28 = arith.constant 0 : index
    %c0_29 = arith.constant 0 : index
    %48 = vector.load %arg3[%c0_28, %c0_29] : memref<8x128xf32, #tpu.memory_space<vmem>>, vector<8x128xf32>
    tpu.vector_store %arg3[%c0_28, %c0_29], %47 {strides = array<i32>} : memref<8x128xf32, #tpu.memory_space<vmem>>, vector<8x128xf32>,
    return
  }
}

</mosaic_0001>

<llo_original>
// kernel: predictor_forward.1
$region0: #{predictor_forward.1}
  #allocation0 [shape = 'u32[]', space=smem, size = 0x4, offset = 0x4, fixed_abs, tag = 'smem constant byte address 0x4 - core index']
  #allocation1 [shape = 'u32[144,128]{1,0:T(1,128)}', space=vmem, size = 0x12000, scoped, tag = 'internal scratch']
  %s0 = inlined_call_operand.vmem [shape: f32[8,48], index: 0, kind: input, shape index: {}]
  %s1 = inlined_call_operand.hbm [shape: f32[304,128], index: 1, kind: input, shape index: {}]
  %s2 = inlined_call_operand.hbm [shape: f32[48,128], index: 2, kind: input, shape index: {}]
  %s3 = inlined_call_operand.vmem [shape: f32[8,128], index: 3, kind: output, shape index: {0}]
  %s4 = inlined_call_operand.hbm [shape: f32[1,1], index: 4, kind: output, shape index: {1}]
  %5 = xla_tuple %s3, %s4
  %s6 = sld [smem:[#allocation0]]
  $region38: #{predictor_forward.1} parent=0
    _
  %s8 = ssub.s32 1, %s6
  %s9 = scalar_select 0, %s8, %s6
  $region1: #{predictor_forward.1} parent=0
    #allocation2 [shape = 'u8[155648]{0}', space=vmem, size = 0x26000, scoped, tag = 'input window, operand 1, single buffered']
    #allocation3 [shape = 's32[1]{0}', space=sflag, size = 0x4, scoped, tag = 'scoped memory for predictor_forward.1']
    #allocation4 [shape = 's32[1]{0}', space=sflag, size = 0x4, scoped, tag = 'scoped memory for predictor_forward.1']
    #allocation5 [shape = 'u8[24576]{0}', space=vmem, size = 0x6000, scoped, tag = 'input window, operand 2, single buffered']
    #allocation6 [shape = 's32[1]{0}', space=sflag, size = 0x4, scoped, tag = 'scoped memory for predictor_forward.1']
    #allocation7 [shape = 'u8[512]{0}', space=smem, size = 0x200, scoped, tag = 'output window, operand 1, single buffered']
    %10 = vsyncpa [#allocation3], 0
    %11 = vsyncpa [#allocation6], 0
    %12 = vsyncpa [#allocation4], 0
    // Predicated region
    $region2: #{predictor_forward.1} parent=1 // pred_check
      _
    $region3: #{predictor_forward.1} parent=1 // pred_check_branch
      %14 = sbr.rel (0) target = $region5
    $region4: #{predictor_forward.1} parent=1 // pred_region
      _
    $region5: #{predictor_forward.1} parent=1 // pred_fallthru
      _
    // Predicated region
    $region6: #{predictor_forward.1} parent=1 // pred_check
      _
    $region7: #{predictor_forward.1} parent=1 // pred_check_branch
      %16 = sbr.rel (0) target = $region9
    $region8: #{predictor_forward.1} parent=1 // pred_region
      %s18 = ssub.s32 4864, 4864
      %19 = vsyncadd [#allocation3], %s18
      %s20 = sshll.u32 [#allocation2], 4
      %s21 = int_to_ptr.vmem [resolvable:$true] %s20
      %26 = dma.hbm_to_vmem [thread:$0]  %s1, 4864, %s21, [#allocation3], 128, 128, 8
    $region9: #{predictor_forward.1} parent=1 // pred_fallthru
      _
    // Predicated region
    $region10: #{predictor_forward.1} parent=1 // pred_check
      _
    $region11: #{predictor_forward.1} parent=1 // pred_check_branch
      %28 = sbr.rel (0) target = $region13
    $region12: #{predictor_forward.1} parent=1 // pred_region
      %s30 = ssub.s32 768, 768
      %31 = vsyncadd [#allocation6], %s30
      %s32 = sshll.u32 [#allocation5], 4
      %s33 = int_to_ptr.vmem [resolvable:$true] %s32
      %38 = dma.hbm_to_vmem [thread:$0]  %s2, 768, %s33, [#allocation6], 128, 128, 8
    $region13: #{predictor_forward.1} parent=1 // pred_fallthru
      _
    // Predicated region
    $region14: #{predictor_forward.1} parent=1 // pred_check
      _
    $region15: #{predictor_forward.1} parent=1 // pred_check_branch
      %40 = sbr.rel (0) target = $region17
    $region16: #{predictor_forward.1} parent=1 // pred_region
      %41 = dma.done [#allocation3], 4864
    $region17: #{predictor_forward.1} parent=1 // pred_fallthru
      _
    // Predicated region
    $region18: #{predictor_forward.1} parent=1 // pred_check
      _
    $region19: #{predictor_forward.1} parent=1 // pred_check_branch
      %43 = sbr.rel (0) target = $region21
    $region20: #{predictor_forward.1} parent=1 // pred_region
      %44 = dma.done [#allocation6], 768
    $region21: #{predictor_forward.1} parent=1 // pred_fallthru
      _
    %v45 = vld [vmem:[%s0] sm:$0xff]
    %v46 = vld [vmem:[#allocation2] sm:$0xff]
    %v47 = vld [vmem:[#allocation2 + $0x8] sm:$0xff]
    %v48 = vld [vmem:[#allocation2 + $0x10] sm:$0xff]
    %v49 = vld [vmem:[#allocation2 + $0x18] sm:$0xff]
    %v50 = vld [vmem:[#allocation2 + $0x20] sm:$0xff]
    %v51 = vld [vmem:[#allocation2 + $0x28] sm:$0xff]
    %v52 = vld [vmem:[#allocation5] sm:$0xff]
    %vm53 = vcmask 392192
    %v55 = vsel %vm53, %v45, 0
    %57 = vmatprep.subr.mxu0 0.0
    %58 = vmatpush1.msra.mxu0 %v46
    %59 = vmatprep.subr.mxu0 0.0
    %60 = vmatpush1.msra.mxu0 %v47
    %61 = vmatprep.subr.mxu0 0.0
    %62 = vmatpush1.msra.mxu0 %v48
    %63 = vmatprep.subr.mxu0 0.0
    %64 = vmatpush1.msra.mxu0 %v49
    %65 = vmatprep.subr.mxu0 0.0
    %66 = vmatpush1.msra.mxu0 %v50
    %67 = vmatprep.subr.mxu0 0.0
    %68 = vmatpush1.msra.mxu0 %v51
    %69 = vmatprep.subr.mxu0 0.0
    %70 = vmatpush1.msra.mxu0 0.0
    %71 = vmatprep.subr.mxu0 0.0
    %72 = vmatpush1.msra.mxu0 0.0
    %73 = vmatprep.subr.mxu0 0.0
    %74 = vmatpush1.msra.mxu0 0.0
    %75 = vmatprep.subr.mxu0 0.0
    %76 = vmatpush1.msra.mxu0 0.0
    %77 = vmatprep.subr.mxu0 0.0
    %78 = vmatpush1.msra.mxu0 0.0
    %79 = vmatprep.subr.mxu0 0.0
    %80 = vmatpush1.msra.mxu0 0.0
    %81 = vmatprep.subr.mxu0 0.0
    %82 = vmatpush1.msra.mxu0 0.0
    %83 = vmatprep.subr.mxu0 0.0
    %84 = vmatpush1.msra.mxu0 0.0
    %85 = vmatprep.subr.mxu0 0.0
    %86 = vmatpush1.msra.mxu0 0.0
    %87 = vmatprep.subr.mxu0 0.0
    %88 = vmatpush1.msra.mxu0 0.0
    %89 = vmatprep.subr.mxu0 0.0
    %90 = vmatpush1.msra.mxu0 0.0
    %91 = vmatprep.subr.mxu0 0.0
    %92 = vmatpush1.msra.mxu0 0.0
    %93 = vmatprep.subr.mxu0 0.0
    %94 = vmatpush1.msra.mxu0 0.0
    %95 = vmatprep.subr.mxu0 0.0
    %96 = vmatpush1.msra.mxu0 0.0
    %97 = vmatprep.subr.mxu0 0.0
    %98 = vmatpush1.msra.mxu0 0.0
    %99 = vmatprep.subr.mxu0 0.0
    %100 = vmatpush1.msra.mxu0 0.0
    %101 = vmatprep.subr.mxu0 0.0
    %102 = vmatpush1.msra.mxu0 0.0
    %103 = vmatprep.subr.mxu0 0.0
    %104 = vmatpush1.msra.mxu0 0.0
    %105 = vmatprep.subr.mxu0 0.0
    %106 = vmatpush1.msra.mxu0 0.0
    %107 = vmatprep.subr.mxu0 0.0
    %108 = vmatpush1.msra.mxu0 0.0
    %109 = vmatprep.subr.mxu0 0.0
    %110 = vmatpush1.msra.mxu0 0.0
    %111 = vmatprep.subr.mxu0 0.0
    %112 = vmatpush1.msra.mxu0 0.0
    %113 = vmatprep.subr.mxu0 0.0
    %114 = vmatpush1.msra.mxu0 0.0
    %115 = vmatprep.subr.mxu0 0.0
    %116 = vmatpush1.msra.mxu0 0.0
    %117 = vmatprep.subr.mxu0 0.0
    %118 = vmatpush1.msra.mxu0 0.0
    %119 = vmatprep.subr.mxu0 0.0
    %120 = vmatpush1.msra.mxu0 0.0
    %121 = vmatprep.mubr.f32.mxu0 0.0
    %122 = vmatmul.mubr.f32.gmra.mrb[0].mxu0 %v55
    %v123 = vpop.f32.mrb[0].mxu0
    %v124 = vadd.f32 %v52, %v123
    %v125 = vpop.f32.mrb[0].mxu0
    %126 = vdwg.mxu0
    %v127 = vmax.f32 %v124, 0.0
    %v128 = vld [vmem:[#allocation2 + $0xf0] sm:$0xff]
    %v129 = vld [vmem:[#allocation2 + $0xf8] sm:$0xff]
    %v130 = vld [vmem:[#allocation2 + $0x100] sm:$0xff]
    %v131 = vld [vmem:[#allocation2 + $0x108] sm:$0xff]
    %v132 = vld [vmem:[#allocation5 + $0x20] sm:$0xff]
    %vm133 = vcmask 261120
    %v135 = vsel %vm133, %v127, 0
    %137 = vmatprep.subr.mxu0 0.0
    %138 = vmatpush1.msra.mxu0 %v128
    %139 = vmatprep.subr.mxu0 0.0
    %140 = vmatpush1.msra.mxu0 %v129
    %141 = vmatprep.subr.mxu0 0.0
    %142 = vmatpush1.msra.mxu0 %v130
    %143 = vmatprep.subr.mxu0 0.0
    %144 = vmatpush1.msra.mxu0 %v131
    %145 = vmatprep.subr.mxu0 0.0
    %146 = vmatpush1.msra.mxu0 0.0
    %147 = vmatprep.subr.mxu0 0.0
    %148 = vmatpush1.msra.mxu0 0.0
    %149 = vmatprep.subr.mxu0 0.0
    %150 = vmatpush1.msra.mxu0 0.0
    %151 = vmatprep.subr.mxu0 0.0
    %152 = vmatpush1.msra.mxu0 0.0
    %153 = vmatprep.subr.mxu0 0.0
    %154 = vmatpush1.msra.mxu0 0.0
    %155 = vmatprep.subr.mxu0 0.0
    %156 = vmatpush1.msra.mxu0 0.0
    %157 = vmatprep.subr.mxu0 0.0
    %158 = vmatpush1.msra.mxu0 0.0
    %159 = vmatprep.subr.mxu0 0.0
    %160 = vmatpush1.msra.mxu0 0.0
    %161 = vmatprep.subr.mxu0 0.0
    %162 = vmatpush1.msra.mxu0 0.0
    %163 = vmatprep.subr.mxu0 0.0
    %164 = vmatpush1.msra.mxu0 0.0
    %165 = vmatprep.subr.mxu0 0.0
    %166 = vmatpush1.msra.mxu0 0.0
    %167 = vmatprep.subr.mxu0 0.0
    %168 = vmatpush1.msra.mxu0 0.0
    %169 = vmatprep.subr.mxu0 0.0
    %170 = vmatpush1.msra.mxu0 0.0
    %171 = vmatprep.subr.mxu0 0.0
    %172 = vmatpush1.msra.mxu0 0.0
    %173 = vmatprep.subr.mxu0 0.0
    %174 = vmatpush1.msra.mxu0 0.0
    %175 = vmatprep.subr.mxu0 0.0
    %176 = vmatpush1.msra.mxu0 0.0
    %177 = vmatprep.subr.mxu0 0.0
    %178 = vmatpush1.msra.mxu0 0.0
    %179 = vmatprep.subr.mxu0 0.0
    %180 = vmatpush1.msra.mxu0 0.0
    %181 = vmatprep.subr.mxu0 0.0
    %182 = vmatpush1.msra.mxu0 0.0
    %183 = vmatprep.subr.mxu0 0.0
    %184 = vmatpush1.msra.mxu0 0.0
    %185 = vmatprep.subr.mxu0 0.0
    %186 = vmatpush1.msra.mxu0 0.0
    %187 = vmatprep.subr.mxu0 0.0
    %188 = vmatpush1.msra.mxu0 0.0
    %189 = vmatprep.subr.mxu0 0.0
    %190 = vmatpush1.msra.mxu0 0.0
    %191 = vmatprep.subr.mxu0 0.0
    %192 = vmatpush1.msra.mxu0 0.0
    %193 = vmatprep.subr.mxu0 0.0
    %194 = vmatpush1.msra.mxu0 0.0
    %195 = vmatprep.subr.mxu0 0.0
    %196 = vmatpush1.msra.mxu0 0.0
    %197 = vmatprep.subr.mxu0 0.0
    %198 = vmatpush1.msra.mxu0 0.0
    %199 = vmatprep.subr.mxu0 0.0
    %200 = vmatpush1.msra.mxu0 0.0
    %201 = vmatprep.mubr.f32.mxu0 0.0
    %202 = vmatmul.mubr.f32.gmra.mrb[0].mxu0 %v135
    %v203 = vpop.f32.mrb[0].mxu0
    %v204 = vadd.f32 %v132, %v203
    %v205 = vpop.f32.mrb[0].mxu0
    %206 = vdwg.mxu0
    %v207 = vmax.f32 %v204, 0.0
    %v208 = vld [vmem:[#allocation2 + $0x110] sm:$0xff]
    %v209 = vld [vmem:[#allocation2 + $0x118] sm:$0xff]
    %v210 = vld [vmem:[#allocation2 + $0x120] sm:$0xff]
    %v211 = vld [vmem:[#allocation2 + $0x128] sm:$0xff]
    %v212 = vld [vmem:[#allocation5 + $0x28] sm:$0xff]
    %v214 = vsel %vm133, %v207, 0
    %216 = vmatprep.subr.mxu0 0.0
    %217 = vmatpush1.msra.mxu0 %v208
    %218 = vmatprep.subr.mxu0 0.0
    %219 = vmatpush1.msra.mxu0 %v209
    %220 = vmatprep.subr.mxu0 0.0
    %221 = vmatpush1.msra.mxu0 %v210
    %222 = vmatprep.subr.mxu0 0.0
    %223 = vmatpush1.msra.mxu0 %v211
    %224 = vmatprep.subr.mxu0 0.0
    %225 = vmatpush1.msra.mxu0 0.0
    %226 = vmatprep.subr.mxu0 0.0
    %227 = vmatpush1.msra.mxu0 0.0
    %228 = vmatprep.subr.mxu0 0.0
    %229 = vmatpush1.msra.mxu0 0.0
    %230 = vmatprep.subr.mxu0 0.0
    %231 = vmatpush1.msra.mxu0 0.0
    %232 = vmatprep.subr.mxu0 0.0
    %233 = vmatpush1.msra.mxu0 0.0
    %234 = vmatprep.subr.mxu0 0.0
    %235 = vmatpush1.msra.mxu0 0.0
    %236 = vmatprep.subr.mxu0 0.0
    %237 = vmatpush1.msra.mxu0 0.0
    %238 = vmatprep.subr.mxu0 0.0
    %239 = vmatpush1.msra.mxu0 0.0
    %240 = vmatprep.subr.mxu0 0.0
    %241 = vmatpush1.msra.mxu0 0.0
    %242 = vmatprep.subr.mxu0 0.0
    %243 = vmatpush1.msra.mxu0 0.0
    %244 = vmatprep.subr.mxu0 0.0
    %245 = vmatpush1.msra.mxu0 0.0
    %246 = vmatprep.subr.mxu0 0.0
    %247 = vmatpush1.msra.mxu0 0.0
    %248 = vmatprep.subr.mxu0 0.0
    %249 = vmatpush1.msra.mxu0 0.0
    %250 = vmatprep.subr.mxu0 0.0
    %251 = vmatpush1.msra.mxu0 0.0
    %252 = vmatprep.subr.mxu0 0.0
    %253 = vmatpush1.msra.mxu0 0.0
    %254 = vmatprep.subr.mxu0 0.0
    %255 = vmatpush1.msra.mxu0 0.0
    %256 = vmatprep.subr.mxu0 0.0
    %257 = vmatpush1.msra.mxu0 0.0
    %258 = vmatprep.subr.mxu0 0.0
    %259 = vmatpush1.msra.mxu0 0.0
    %260 = vmatprep.subr.mxu0 0.0
    %261 = vmatpush1.msra.mxu0 0.0
    %262 = vmatprep.subr.mxu0 0.0
    %263 = vmatpush1.msra.mxu0 0.0
    %264 = vmatprep.subr.mxu0 0.0
    %265 = vmatpush1.msra.mxu0 0.0
    %266 = vmatprep.subr.mxu0 0.0
    %267 = vmatpush1.msra.mxu0 0.0
    %268 = vmatprep.subr.mxu0 0.0
    %269 = vmatpush1.msra.mxu0 0.0
    %270 = vmatprep.subr.mxu0 0.0
    %271 = vmatpush1.msra.mxu0 0.0
    %272 = vmatprep.subr.mxu0 0.0
    %273 = vmatpush1.msra.mxu0 0.0
    %274 = vmatprep.subr.mxu0 0.0
    %275 = vmatpush1.msra.mxu0 0.0
    %276 = vmatprep.subr.mxu0 0.0
    %277 = vmatpush1.msra.mxu0 0.0
    %278 = vmatprep.subr.mxu0 0.0
    %279 = vmatpush1.msra.mxu0 0.0
    %280 = vmatprep.mubr.f32.mxu0 0.0
    %281 = vmatmul.mubr.f32.gmra.mrb[0].mxu0 %v214
    %v282 = vpop.f32.mrb[0].mxu0
    %v283 = vadd.f32 %v212, %v282
    %v284 = vpop.f32.mrb[0].mxu0
    %285 = vdwg.mxu0
    %v286 = vsub.f32 %v283, %v45
    %v287 = vmul.f32 %v286, %v286
    %v288 = vsel %vm133, %v287, 0.0
    %289 = vadd.xlane.f32.xlu0 %v288
    %v290 = vpop.xlane.xlu0 %289
    %v291 = vrot.slane %v290, 4
    %v292 = vadd.f32 %v290, %v291
    %v293 = vrot.slane %v292, 2
    %v294 = vadd.f32 %v292, %v293
    %v295 = vrot.slane %v294, 1
    %v296 = vadd.f32 %v294, %v295
    %s297 = vtos %v296
    %s298 = smul.f32 %s297, 0.00390625
    %s299 = scalar_lea.smem [#allocation7], 0
    %300 = sst [smem:[%s299]] %s298
    %v301 = vld [vmem:[#allocation2 + $0x30] sm:$0xff]
    %v302 = vld [vmem:[#allocation2 + $0x38] sm:$0xff]
    %v303 = vld [vmem:[#allocation2 + $0x40] sm:$0xff]
    %v304 = vld [vmem:[#allocation2 + $0x48] sm:$0xff]
    %v305 = vld [vmem:[#allocation2 + $0x50] sm:$0xff]
    %v306 = vld [vmem:[#allocation2 + $0x58] sm:$0xff]
    %v307 = vld [vmem:[#allocation2 + $0x60] sm:$0xff]
    %v308 = vld [vmem:[#allocation2 + $0x68] sm:$0xff]
    %v309 = vld [vmem:[#allocation5 + $0x8] sm:$0xff]
    %vm310 = vcmask 523264
    %v311 = vsel %vm310, %v127, 0
    %313 = vmatprep.subr.mxu0 0.0
    %314 = vmatpush1.msra.mxu0 %v301
    %315 = vmatprep.subr.mxu0 0.0
    %316 = vmatpush1.msra.mxu0 %v302
    %317 = vmatprep.subr.mxu0 0.0
    %318 = vmatpush1.msra.mxu0 %v303
    %319 = vmatprep.subr.mxu0 0.0
    %320 = vmatpush1.msra.mxu0 %v304
    %321 = vmatprep.subr.mxu0 0.0
    %322 = vmatpush1.msra.mxu0 %v305
    %323 = vmatprep.subr.mxu0 0.0
    %324 = vmatpush1.msra.mxu0 %v306
    %325 = vmatprep.subr.mxu0 0.0
    %326 = vmatpush1.msra.mxu0 %v307
    %327 = vmatprep.subr.mxu0 0.0
    %328 = vmatpush1.msra.mxu0 %v308
    %329 = vmatprep.subr.mxu0 0.0
    %330 = vmatpush1.msra.mxu0 0.0
    %331 = vmatprep.subr.mxu0 0.0
    %332 = vmatpush1.msra.mxu0 0.0
    %333 = vmatprep.subr.mxu0 0.0
    %334 = vmatpush1.msra.mxu0 0.0
    %335 = vmatprep.subr.mxu0 0.0
    %336 = vmatpush1.msra.mxu0 0.0
    %337 = vmatprep.subr.mxu0 0.0
    %338 = vmatpush1.msra.mxu0 0.0
    %339 = vmatprep.subr.mxu0 0.0
    %340 = vmatpush1.msra.mxu0 0.0
    %341 = vmatprep.subr.mxu0 0.0
    %342 = vmatpush1.msra.mxu0 0.0
    %343 = vmatprep.subr.mxu0 0.0
    %344 = vmatpush1.msra.mxu0 0.0
    %345 = vmatprep.subr.mxu0 0.0
    %346 = vmatpush1.msra.mxu0 0.0
    %347 = vmatprep.subr.mxu0 0.0
    %348 = vmatpush1.msra.mxu0 0.0
    %349 = vmatprep.subr.mxu0 0.0
    %350 = vmatpush1.msra.mxu0 0.0
    %351 = vmatprep.subr.mxu0 0.0
    %352 = vmatpush1.msra.mxu0 0.0
    %353 = vmatprep.subr.mxu0 0.0
    %354 = vmatpush1.msra.mxu0 0.0
    %355 = vmatprep.subr.mxu0 0.0
    %356 = vmatpush1.msra.mxu0 0.0
    %357 = vmatprep.subr.mxu0 0.0
    %358 = vmatpush1.msra.mxu0 0.0
    %359 = vmatprep.subr.mxu0 0.0
    %360 = vmatpush1.msra.mxu0 0.0
    %361 = vmatprep.subr.mxu0 0.0
    %362 = vmatpush1.msra.mxu0 0.0
    %363 = vmatprep.subr.mxu0 0.0
    %364 = vmatpush1.msra.mxu0 0.0
    %365 = vmatprep.subr.mxu0 0.0
    %366 = vmatpush1.msra.mxu0 0.0
    %367 = vmatprep.subr.mxu0 0.0
    %368 = vmatpush1.msra.mxu0 0.0
    %369 = vmatprep.subr.mxu0 0.0
    %370 = vmatpush1.msra.mxu0 0.0
    %371 = vmatprep.subr.mxu0 0.0
    %372 = vmatpush1.msra.mxu0 0.0
    %373 = vmatprep.subr.mxu0 0.0
    %374 = vmatpush1.msra.mxu0 0.0
    %375 = vmatprep.subr.mxu0 0.0
    %376 = vmatpush1.msra.mxu0 0.0
    %377 = vmatprep.mubr.f32.mxu0 0.0
    %378 = vmatmul.mubr.f32.gmra.mrb[0].mxu0 %v311
    %v379 = vpop.f32.mrb[0].mxu0
    %v380 = vadd.f32 %v309, %v379
    %v381 = vpop.f32.mrb[0].mxu0
    %382 = vdwg.mxu0
    %v383 = vmax.f32 %v380, 0.0
    %v384 = vld [vmem:[#allocation2 + $0x70] sm:$0xff]
    %v385 = vld [vmem:[#allocation2 + $0x78] sm:$0xff]
    %v386 = vld [vmem:[#allocation2 + $0x80] sm:$0xff]
    %v387 = vld [vmem:[#allocation2 + $0x88] sm:$0xff]
    %v388 = vld [vmem:[#allocation2 + $0x90] sm:$0xff]
    %v389 = vld [vmem:[#allocation2 + $0x98] sm:$0xff]
    %v390 = vld [vmem:[#allocation2 + $0xa0] sm:$0xff]
    %v391 = vld [vmem:[#allocation2 + $0xa8] sm:$0xff]
    %v392 = vld [vmem:[#allocation5 + $0x10] sm:$0xff]
    %v394 = vsel %vm310, %v383, 0
    %396 = vmatprep.subr.mxu0 0.0
    %397 = vmatpush1.msra.mxu0 %v384
    %398 = vmatprep.subr.mxu0 0.0
    %399 = vmatpush1.msra.mxu0 %v385
    %400 = vmatprep.subr.mxu0 0.0
    %401 = vmatpush1.msra.mxu0 %v386
    %402 = vmatprep.subr.mxu0 0.0
    %403 = vmatpush1.msra.mxu0 %v387
    %404 = vmatprep.subr.mxu0 0.0
    %405 = vmatpush1.msra.mxu0 %v388
    %406 = vmatprep.subr.mxu0 0.0
    %407 = vmatpush1.msra.mxu0 %v389
    %408 = vmatprep.subr.mxu0 0.0
    %409 = vmatpush1.msra.mxu0 %v390
    %410 = vmatprep.subr.mxu0 0.0
    %411 = vmatpush1.msra.mxu0 %v391
    %412 = vmatprep.subr.mxu0 0.0
    %413 = vmatpush1.msra.mxu0 0.0
    %414 = vmatprep.subr.mxu0 0.0
    %415 = vmatpush1.msra.mxu0 0.0
    %416 = vmatprep.subr.mxu0 0.0
    %417 = vmatpush1.msra.mxu0 0.0
    %418 = vmatprep.subr.mxu0 0.0
    %419 = vmatpush1.msra.mxu0 0.0
    %420 = vmatprep.subr.mxu0 0.0
    %421 = vmatpush1.msra.mxu0 0.0
    %422 = vmatprep.subr.mxu0 0.0
    %423 = vmatpush1.msra.mxu0 0.0
    %424 = vmatprep.subr.mxu0 0.0
    %425 = vmatpush1.msra.mxu0 0.0
    %426 = vmatprep.subr.mxu0 0.0
    %427 = vmatpush1.msra.mxu0 0.0
    %428 = vmatprep.subr.mxu0 0.0
    %429 = vmatpush1.msra.mxu0 0.0
    %430 = vmatprep.subr.mxu0 0.0
    %431 = vmatpush1.msra.mxu0 0.0
    %432 = vmatprep.subr.mxu0 0.0
    %433 = vmatpush1.msra.mxu0 0.0
    %434 = vmatprep.subr.mxu0 0.0
    %435 = vmatpush1.msra.mxu0 0.0
    %436 = vmatprep.subr.mxu0 0.0
    %437 = vmatpush1.msra.mxu0 0.0
    %438 = vmatprep.subr.mxu0 0.0
    %439 = vmatpush1.msra.mxu0 0.0
    %440 = vmatprep.subr.mxu0 0.0
    %441 = vmatpush1.msra.mxu0 0.0
    %442 = vmatprep.subr.mxu0 0.0
    %443 = vmatpush1.msra.mxu0 0.0
    %444 = vmatprep.subr.mxu0 0.0
    %445 = vmatpush1.msra.mxu0 0.0
    %446 = vmatprep.subr.mxu0 0.0
    %447 = vmatpush1.msra.mxu0 0.0
    %448 = vmatprep.subr.mxu0 0.0
    %449 = vmatpush1.msra.mxu0 0.0
    %450 = vmatprep.subr.mxu0 0.0
    %451 = vmatpush1.msra.mxu0 0.0
    %452 = vmatprep.subr.mxu0 0.0
    %453 = vmatpush1.msra.mxu0 0.0
    %454 = vmatprep.subr.mxu0 0.0
    %455 = vmatpush1.msra.mxu0 0.0
    %456 = vmatprep.subr.mxu0 0.0
    %457 = vmatpush1.msra.mxu0 0.0
    %458 = vmatprep.subr.mxu0 0.0
    %459 = vmatpush1.msra.mxu0 0.0
    %460 = vmatprep.mubr.f32.mxu0 0.0
    %461 = vmatmul.mubr.f32.gmra.mrb[0].mxu0 %v394
    %v462 = vpop.f32.mrb[0].mxu0
    %v463 = vadd.f32 %v392, %v462
    %v464 = vpop.f32.mrb[0].mxu0
    %465 = vdwg.mxu0
    %v466 = vmax.f32 %v463, 0.0
    %v467 = vld [vmem:[#allocation2 + $0xb0] sm:$0xff]
    %v468 = vld [vmem:[#allocation2 + $0xb8] sm:$0xff]
    %v469 = vld [vmem:[#allocation2 + $0xc0] sm:$0xff]
    %v470 = vld [vmem:[#allocation2 + $0xc8] sm:$0xff]
    %v471 = vld [vmem:[#allocation2 + $0xd0] sm:$0xff]
    %v472 = vld [vmem:[#allocation2 + $0xd8] sm:$0xff]
    %v473 = vld [vmem:[#allocation2 + $0xe0] sm:$0xff]
    %v474 = vld [vmem:[#allocation2 + $0xe8] sm:$0xff]
    %v475 = vld [vmem:[#allocation5 + $0x18] sm:$0xff]
    %v477 = vsel %vm310, %v466, 0
    %479 = vmatprep.subr.mxu0 0.0
    %480 = vmatpush1.msra.mxu0 %v467
    %481 = vmatprep.subr.mxu0 0.0
    %482 = vmatpush1.msra.mxu0 %v468
    %483 = vmatprep.subr.mxu0 0.0
    %484 = vmatpush1.msra.mxu0 %v469
    %485 = vmatprep.subr.mxu0 0.0
    %486 = vmatpush1.msra.mxu0 %v470
    %487 = vmatprep.subr.mxu0 0.0
    %488 = vmatpush1.msra.mxu0 %v471
    %489 = vmatprep.subr.mxu0 0.0
    %490 = vmatpush1.msra.mxu0 %v472
    %491 = vmatprep.subr.mxu0 0.0
    %492 = vmatpush1.msra.mxu0 %v473
    %493 = vmatprep.subr.mxu0 0.0
    %494 = vmatpush1.msra.mxu0 %v474
    %495 = vmatprep.subr.mxu0 0.0
    %496 = vmatpush1.msra.mxu0 0.0
    %497 = vmatprep.subr.mxu0 0.0
    %498 = vmatpush1.msra.mxu0 0.0
    %499 = vmatprep.subr.mxu0 0.0
    %500 = vmatpush1.msra.mxu0 0.0
    %501 = vmatprep.subr.mxu0 0.0
    %502 = vmatpush1.msra.mxu0 0.0
    %503 = vmatprep.subr.mxu0 0.0
    %504 = vmatpush1.msra.mxu0 0.0
    %505 = vmatprep.subr.mxu0 0.0
    %506 = vmatpush1.msra.mxu0 0.0
    %507 = vmatprep.subr.mxu0 0.0
    %508 = vmatpush1.msra.mxu0 0.0
    %509 = vmatprep.subr.mxu0 0.0
    %510 = vmatpush1.msra.mxu0 0.0
    %511 = vmatprep.subr.mxu0 0.0
    %512 = vmatpush1.msra.mxu0 0.0
    %513 = vmatprep.subr.mxu0 0.0
    %514 = vmatpush1.msra.mxu0 0.0
    %515 = vmatprep.subr.mxu0 0.0
    %516 = vmatpush1.msra.mxu0 0.0
    %517 = vmatprep.subr.mxu0 0.0
    %518 = vmatpush1.msra.mxu0 0.0
    %519 = vmatprep.subr.mxu0 0.0
    %520 = vmatpush1.msra.mxu0 0.0
    %521 = vmatprep.subr.mxu0 0.0
    %522 = vmatpush1.msra.mxu0 0.0
    %523 = vmatprep.subr.mxu0 0.0
    %524 = vmatpush1.msra.mxu0 0.0
    %525 = vmatprep.subr.mxu0 0.0
    %526 = vmatpush1.msra.mxu0 0.0
    %527 = vmatprep.subr.mxu0 0.0
    %528 = vmatpush1.msra.mxu0 0.0
    %529 = vmatprep.subr.mxu0 0.0
    %530 = vmatpush1.msra.mxu0 0.0
    %531 = vmatprep.subr.mxu0 0.0
    %532 = vmatpush1.msra.mxu0 0.0
    %533 = vmatprep.subr.mxu0 0.0
    %534 = vmatpush1.msra.mxu0 0.0
    %535 = vmatprep.subr.mxu0 0.0
    %536 = vmatpush1.msra.mxu0 0.0
    %537 = vmatprep.subr.mxu0 0.0
    %538 = vmatpush1.msra.mxu0 0.0
    %539 = vmatprep.subr.mxu0 0.0
    %540 = vmatpush1.msra.mxu0 0.0
    %541 = vmatprep.subr.mxu0 0.0
    %542 = vmatpush1.msra.mxu0 0.0
    %543 = vmatprep.mubr.f32.mxu0 0.0
    %544 = vmatmul.mubr.f32.gmra.mrb[0].mxu0 %v477
    %v545 = vpop.f32.mrb[0].mxu0
    %v546 = vadd.f32 %v475, %v545
    %v547 = vpop.f32.mrb[0].mxu0
    %548 = vdwg.mxu0
    %549 = vst [vmem:[%s3] sm:$0xff] %v546
    // Predicated region
    $region22: #{predictor_forward.1} parent=1 // pred_check
      _
    $region23: #{predictor_forward.1} parent=1 // pred_check_branch
      %551 = sbr.rel (0) target = $region25
    $region24: #{predictor_forward.1} parent=1 // pred_region
      _
    $region25: #{predictor_forward.1} parent=1 // pred_fallthru
      _
    // Predicated region
    $region26: #{predictor_forward.1} parent=1 // pred_check
      _
    $region27: #{predictor_forward.1} parent=1 // pred_check_branch
      %553 = sbr.rel (0) target = $region29
    $region28: #{predictor_forward.1} parent=1 // pred_region
      %s555 = ssub.s32 16, 16
      %556 = vsyncadd [#allocation4], %s555
      %559 = dma.smem_to_hbm [#allocation7], 16, %s4, [#allocation4]
    $region29: #{predictor_forward.1} parent=1 // pred_fallthru
      _
    // Predicated region
    $region30: #{predictor_forward.1} parent=1 // pred_check
      _
    $region31: #{predictor_forward.1} parent=1 // pred_check_branch
      %561 = sbr.rel (0) target = $region33
    $region32: #{predictor_forward.1} parent=1 // pred_region
      _
    $region33: #{predictor_forward.1} parent=1 // pred_fallthru
      _
    // Predicated region
    $region34: #{predictor_forward.1} parent=1 // pred_check
      _
    $region35: #{predictor_forward.1} parent=1 // pred_check_branch
      %563 = sbr.rel (0) target = $region37
    $region36: #{predictor_forward.1} parent=1 // pred_region
      %564 = dma.done [#allocation4], 16
    $region37: #{predictor_forward.1} parent=1 // pred_fallthru
      _
    %565 = sfence
    %566 = vsyncpa [#allocation3], 1
    %567 = vsyncpa [#allocation6], 1
    %568 = vsyncpa [#allocation4], 1

</llo_original>
